<compile_context>
chip_gen: v7x
topology: tpu7x:2x2x1
jax: 0.10.0
libtpu: 0.0.40
codegen_flags: <defaults>
</compile_context>

<pallas_src>
import jax
import jax.numpy as jnp
from jax.experimental import pallas as pl
from jax.experimental.pallas import tpu as pltpu


def _round_up(a, m):
    return -(-a // m) * m


def make_mlp_lora_kernel(layer_dims):
    """layer_dims: tuple of (in_i, out_i) per base Linear.

    Batch-in-lanes layout: every activation tile is (features, batch_tile)."""
    num_layers = len(layer_dims)

    def kernel(x_ref, w_ref, b_ref, a_ref, u_ref, out_ref):
        # x_ref : (D_in, Bt)            bf16  activations, batch in lanes
        # w_ref : (L, max_out, max_in)  bf16  base weights   (zero padded)
        # b_ref : (L, max_out, 1)       f32   base biases
        # a_ref : (L, rank, max_in)     bf16  LoRA down-proj (zero padded)
        # u_ref : (L, max_out, rank)    bf16  LoRA up-proj   (zero padded)
        # out_ref: (D_out, Bt)          f32
        x = x_ref[...]                      # bf16, (in_0, Bt)
        z = x                               # "lora_output" path
        x_f32 = None
        for i, (din, dout) in enumerate(layer_dims):
            w = w_ref[i][:dout, :din]       # (out_i, in_i)
            aw = a_ref[i][:, :din]          # (rank,  in_i)
            uw = u_ref[i][:dout, :]         # (out_i, rank)
            bias = b_ref[i][:dout, :]       # (out_i, 1), f32
            if i == 0:
                # Layer 0: z is x, so the base matmul and the LoRA down-proj
                # share the same RHS -> fuse them into one MXU pass.
                wa = jnp.concatenate([w, aw], axis=0)        # (out_0+rank, in_0)
                fused = jnp.dot(wa, x, preferred_element_type=jnp.float32)
                base, a = fused[:dout], fused[dout:]
            else:
                base = jnp.dot(w, x, preferred_element_type=jnp.float32)
                # NOTE: for rank=4 this tiny dot could be a VPU broadcast-mul +
                # reduce instead of an MXU pass; kept on the MXU for clarity.
                a = jnp.dot(aw, z, preferred_element_type=jnp.float32)
            lora = jnp.dot(uw, a.astype(jnp.bfloat16),
                           preferred_element_type=jnp.float32)
            x_f32 = base + bias + lora                       # f32 bias add
            x = x_f32.astype(jnp.bfloat16)                   # feeds next dot
            if i < num_layers - 1:
                z = jnp.tanh(a).astype(jnp.bfloat16)         # tanh in f32
        out_ref[...] = x_f32

    return kernel


def mlp_lora_forward(x, base_params, lora_params, *, block_b=512):
    """x: (B, D_in) float32.
    base_params: list of (W (out,in), b (out,)) -- PyTorch Linear layout.
    lora_params: list of (A (rank,in), B (out,rank))."""
    num_layers = len(base_params)
    B, d_in = x.shape
    rank = int(lora_params[0][0].shape[0])
    layer_dims = tuple((int(W.shape[1]), int(W.shape[0])) for W, _ in base_params)
    d_out = layer_dims[-1][1]
    max_in = max(d for d, _ in layer_dims)
    max_out = max(d for _, d in layer_dims)

    # ---- stack all per-layer parameters into 4 zero-padded arrays ----------
    W_all = jnp.zeros((num_layers, max_out, max_in), jnp.float32)
    b_all = jnp.zeros((num_layers, max_out, 1), jnp.float32)
    A_all = jnp.zeros((num_layers, rank, max_in), jnp.float32)
    U_all = jnp.zeros((num_layers, max_out, rank), jnp.float32)
    for i, ((W, b), (A, U)) in enumerate(zip(base_params, lora_params)):
        din, dout = layer_dims[i]
        W_all = W_all.at[i, :dout, :din].set(W.astype(jnp.float32))
        b_all = b_all.at[i, :dout, 0].set(b.astype(jnp.float32))
        A_all = A_all.at[i, :, :din].set(A.astype(jnp.float32))
        U_all = U_all.at[i, :dout, :].set(U.astype(jnp.float32))
    W_all = W_all.astype(jnp.bfloat16)
    A_all = A_all.astype(jnp.bfloat16)
    U_all = U_all.astype(jnp.bfloat16)

    # ---- batch tiling: batch lives in the lane dimension --------------------
    block_b = max(128, min(_round_up(int(block_b), 128), _round_up(B, 128)))
    Bp = _round_up(B, block_b)
    # Keep >= 2 grid steps when the batch allows it so the "parallel" grid axis
    # can be sharded across v7x's two TensorCores.
    if Bp // block_b < 2 and B > 128:
        block_b = _round_up(-(-B // 2), 128)
        Bp = _round_up(B, block_b)
    grid = (Bp // block_b,)

    xt = jnp.zeros((d_in, Bp), jnp.bfloat16)
    xt = xt.at[:, :B].set(x.T.astype(jnp.bfloat16))

    # ---- explicit VMEM budget (portable across v5e/v6e/v7x) -----------------
    weight_bytes = (W_all.size + A_all.size + U_all.size) * 2 + b_all.size * 4
    vmem_est = (2 * d_in * block_b * 2        # x tile, bf16, double buffered
                + 2 * d_out * block_b * 4     # out tile, f32, double buffered
                + 2 * weight_bytes            # weights (worst-case 2 buffers)
                + (2 << 20))                  # compiler scratch headroom
    vmem_limit = int(min(max(vmem_est, 16 << 20), 48 << 20))

    kernel = make_mlp_lora_kernel(layer_dims)
    x_spec = pl.BlockSpec((d_in, block_b), lambda i: (0, i))
    out_spec = pl.BlockSpec((d_out, block_b), lambda i: (0, i))

    def _const_spec(shape, single_buffer):
        # Grid-invariant blocks: no need to double-buffer them.
        kwargs = {"pipeline_mode": pl.Buffered(1)} if single_buffer else {}
        return pl.BlockSpec(shape, lambda i: (0, 0, 0), **kwargs)

    def _run(single_buffer):
        call = pl.pallas_call(
            kernel,
            out_shape=jax.ShapeDtypeStruct((d_out, Bp), jnp.float32),
            grid=grid,
            in_specs=[
                x_spec,
                _const_spec(W_all.shape, single_buffer),
                _const_spec(b_all.shape, single_buffer),
                _const_spec(A_all.shape, single_buffer),
                _const_spec(U_all.shape, single_buffer),
            ],
            out_specs=out_spec,
            compiler_params=pltpu.CompilerParams(
                dimension_semantics=("parallel",),
                vmem_limit_bytes=vmem_limit),
        )
        return call(xt, W_all, b_all, A_all, U_all)

    try:
        out_t = _run(single_buffer=True)
    except Exception:
        # pl.Buffered(1) not supported by this jax build -> fall back to the
        # default double buffering (weights are tiny, so this is harmless).
        out_t = _run(single_buffer=False)

    return out_t[:, :B].T.astype(x.dtype)


def ref_forward(x, base_params, lora_params):
    """Pure-JAX f32 reference mirroring the PyTorch forward."""
    num_layers = len(base_params)
    z = x
    for i, ((W, b), (A, U)) in enumerate(zip(base_params, lora_params)):
        x = x @ W.T + b
        a = z @ A.T
        x = x + a @ U.T
        if i < num_layers - 1:
            z = jnp.tanh(a)
    return x


if __name__ == "__main__":
    # Shapes consistent with the module: the LoRA hidden path forces every
    # Linear after the first to have in_features == rank, so the base MLP is
    # Linear(D_in, rank) -> Linear(rank, rank) -> Linear(rank, D_out).
    B, D_IN, RANK, D_OUT = 2, 16, 4, 8
    layer_dims = [(D_IN, RANK), (RANK, RANK), (RANK, D_OUT)]  # (in, out) per Linear

    key = jax.random.PRNGKey(0)
    keys = jax.random.split(key, 1 + 4 * len(layer_dims))
    x = jax.random.normal(keys[0], (B, D_IN), dtype=jnp.float32)

    base_params, lora_params = [], []
    k = 1
    for (din, dout) in layer_dims:
        W = jax.random.normal(keys[k], (dout, din), jnp.float32) * 0.1; k += 1
        b = jax.random.normal(keys[k], (dout,), jnp.float32) * 0.1; k += 1
        A = jax.random.normal(keys[k], (RANK, din), jnp.float32) * 0.1; k += 1
        U = jax.random.normal(keys[k], (dout, RANK), jnp.float32) * 0.1; k += 1
        base_params.append((W, b))
        lora_params.append((A, U))

    out = mlp_lora_forward(x, base_params, lora_params)
    out = jax.block_until_ready(out)

    ref = ref_forward(x, base_params, lora_params)
    assert out.shape == (B, D_OUT)
    # bf16 MXU inputs (f32 accumulation) -> relaxed tolerance vs. f32 reference.
    assert jnp.allclose(out, ref, atol=3e-2, rtol=3e-2), (out, ref)

    print("KERNEL_OK")
</pallas_src>

<mosaic_0001>
module attributes {stable_mosaic.version = 11 : i64} {
  func.func @kernel(%arg0: i32, %arg1: memref<16x128xbf16, #tpu.memory_space<vmem>>, %arg2: memref<3x8x16xbf16, #tpu.memory_space<vmem>>, %arg3: memref<3x8x1xf32, #tpu.memory_space<vmem>>, %arg4: memref<3x4x16xbf16, #tpu.memory_space<vmem>>, %arg5: memref<3x8x4xbf16, #tpu.memory_space<vmem>>, %arg6: memref<8x128xf32, #tpu.memory_space<vmem>>) attributes {dimension_semantics = [#tpu.dimension_semantics<parallel>], iteration_bounds = array<i64: 1>, scalar_prefetch = 0 : i64, scratch_operands = 0 : i64, tpu.core_type = #tpu.core_type<tc>, window_params = [{transform_indices = @transform_0, window_bounds = array<i64: 16, 128>}, {pipeline_mode = #tpu.pipeline_mode<synchronous>, transform_indices = @transform_1, window_bounds = array<i64: 3, 8, 16>}, {pipeline_mode = #tpu.pipeline_mode<synchronous>, transform_indices = @transform_2, window_bounds = array<i64: 3, 8, 1>}, {pipeline_mode = #tpu.pipeline_mode<synchronous>, transform_indices = @transform_3, window_bounds = array<i64: 3, 4, 16>}, {pipeline_mode = #tpu.pipeline_mode<synchronous>, transform_indices = @transform_4, window_bounds = array<i64: 3, 8, 4>}, {transform_indices = @transform_5, window_bounds = array<i64: 8, 128>}]} {
    %c0 = arith.constant 0 : index
    %c0_0 = arith.constant 0 : index
    %0 = vector.load %arg1[%c0, %c0_0] : memref<16x128xbf16, #tpu.memory_space<vmem>>, vector<16x128xbf16>
    %c0_1 = arith.constant 0 : index
    %c0_2 = arith.constant 0 : index
    %c0_3 = arith.constant 0 : index
    %1 = vector.load %arg2[%c0_1, %c0_2, %c0_3] : memref<3x8x16xbf16, #tpu.memory_space<vmem>>, vector<1x8x16xbf16>
    %2 = vector.shape_cast %1 : vector<1x8x16xbf16> to vector<8x16xbf16>
    %3 = vector.extract_strided_slice %2 {offsets = [0, 0], sizes = [4, 16], strides = [1, 1]} : vector<8x16xbf16> to vector<4x16xbf16>
    %c0_4 = arith.constant 0 : index
    %c0_5 = arith.constant 0 : index
    %c0_6 = arith.constant 0 : index
    %4 = vector.load %arg4[%c0_4, %c0_5, %c0_6] : memref<3x4x16xbf16, #tpu.memory_space<vmem>>, vector<1x4x16xbf16>
    %5 = vector.shape_cast %4 : vector<1x4x16xbf16> to vector<4x16xbf16>
    %c0_7 = arith.constant 0 : index
    %c0_8 = arith.constant 0 : index
    %c0_9 = arith.constant 0 : index
    %6 = vector.load %arg5[%c0_7, %c0_8, %c0_9] : memref<3x8x4xbf16, #tpu.memory_space<vmem>>, vector<1x8x4xbf16>
    %7 = vector.shape_cast %6 : vector<1x8x4xbf16> to vector<8x4xbf16>
    %8 = vector.extract_strided_slice %7 {offsets = [0, 0], sizes = [4, 4], strides = [1, 1]} : vector<8x4xbf16> to vector<4x4xbf16>
    %c0_10 = arith.constant 0 : index
    %c0_11 = arith.constant 0 : index
    %c0_12 = arith.constant 0 : index
    %9 = vector.load %arg3[%c0_10, %c0_11, %c0_12] : memref<3x8x1xf32, #tpu.memory_space<vmem>>, vector<1x8x1xf32>
    %10 = vector.shape_cast %9 : vector<1x8x1xf32> to vector<8x1xf32>
    %11 = vector.extract_strided_slice %10 {offsets = [0, 0], sizes = [4, 1], strides = [1, 1]} : vector<8x1xf32> to vector<4x1xf32>
    %12 = tpu.concatenate %3, %5 in 0 : vector<4x16xbf16>, vector<4x16xbf16> -> vector<8x16xbf16>
    %cst = arith.constant dense<0.000000e+00> : vector<8x128xf32>
    %13 = tpu.matmul %12, %0, %cst {dimension_numbers = #tpu.dot_dimension_numbers<[1], [0], [0], [1], [0, 0, 1, 1], [], []>} : vector<8x16xbf16>, vector<16x128xbf16>, vector<8x128xf32> -> vector<8x128xf32>
    %14 = vector.extract_strided_slice %13 {offsets = [0, 0], sizes = [4, 128], strides = [1, 1]} : vector<8x128xf32> to vector<4x128xf32>
    %15 = vector.extract_strided_slice %13 {offsets = [4, 0], sizes = [4, 128], strides = [1, 1]} : vector<8x128xf32> to vector<4x128xf32>
    %16 = arith.truncf %15 : vector<4x128xf32> to vector<4x128xbf16>
    %cst_13 = arith.constant dense<0.000000e+00> : vector<4x128xf32>
    %17 = tpu.matmul %8, %16, %cst_13 {dimension_numbers = #tpu.dot_dimension_numbers<[1], [0], [0], [1], [0, 0, 1, 1], [], []>} : vector<4x4xbf16>, vector<4x128xbf16>, vector<4x128xf32> -> vector<4x128xf32>
    %18 = vector.broadcast %11 : vector<4x1xf32> to vector<4x128xf32>
    %19 = arith.addf %14, %18 : vector<4x128xf32>
    %20 = arith.addf %19, %17 : vector<4x128xf32>
    %21 = arith.truncf %20 : vector<4x128xf32> to vector<4x128xbf16>
    %22 = math.tanh %15 : vector<4x128xf32>
    %23 = arith.truncf %22 : vector<4x128xf32> to vector<4x128xbf16>
    %c1 = arith.constant 1 : index
    %c0_14 = arith.constant 0 : index
    %c0_15 = arith.constant 0 : index
    %24 = vector.load %arg2[%c1, %c0_14, %c0_15] : memref<3x8x16xbf16, #tpu.memory_space<vmem>>, vector<1x8x16xbf16>
    %25 = vector.shape_cast %24 : vector<1x8x16xbf16> to vector<8x16xbf16>
    %26 = vector.extract_strided_slice %25 {offsets = [0, 0], sizes = [4, 4], strides = [1, 1]} : vector<8x16xbf16> to vector<4x4xbf16>
    %c1_16 = arith.constant 1 : index
    %c0_17 = arith.constant 0 : index
    %c0_18 = arith.constant 0 : index
    %27 = vector.load %arg4[%c1_16, %c0_17, %c0_18] : memref<3x4x16xbf16, #tpu.memory_space<vmem>>, vector<1x4x16xbf16>
    %28 = vector.shape_cast %27 : vector<1x4x16xbf16> to vector<4x16xbf16>
    %29 = vector.extract_strided_slice %28 {offsets = [0, 0], sizes = [4, 4], strides = [1, 1]} : vector<4x16xbf16> to vector<4x4xbf16>
    %c1_19 = arith.constant 1 : index
    %c0_20 = arith.constant 0 : index
    %c0_21 = arith.constant 0 : index
    %30 = vector.load %arg5[%c1_19, %c0_20, %c0_21] : memref<3x8x4xbf16, #tpu.memory_space<vmem>>, vector<1x8x4xbf16>
    %31 = vector.shape_cast %30 : vector<1x8x4xbf16> to vector<8x4xbf16>
    %32 = vector.extract_strided_slice %31 {offsets = [0, 0], sizes = [4, 4], strides = [1, 1]} : vector<8x4xbf16> to vector<4x4xbf16>
    %c1_22 = arith.constant 1 : index
    %c0_23 = arith.constant 0 : index
    %c0_24 = arith.constant 0 : index
    %33 = vector.load %arg3[%c1_22, %c0_23, %c0_24] : memref<3x8x1xf32, #tpu.memory_space<vmem>>, vector<1x8x1xf32>
    %34 = vector.shape_cast %33 : vector<1x8x1xf32> to vector<8x1xf32>
    %35 = vector.extract_strided_slice %34 {offsets = [0, 0], sizes = [4, 1], strides = [1, 1]} : vector<8x1xf32> to vector<4x1xf32>
    %cst_25 = arith.constant dense<0.000000e+00> : vector<4x128xf32>
    %36 = tpu.matmul %26, %21, %cst_25 {dimension_numbers = #tpu.dot_dimension_numbers<[1], [0], [0], [1], [0, 0, 1, 1], [], []>} : vector<4x4xbf16>, vector<4x128xbf16>, vector<4x128xf32> -> vector<4x128xf32>
    %cst_26 = arith.constant dense<0.000000e+00> : vector<4x128xf32>
    %37 = tpu.matmul %29, %23, %cst_26 {dimension_numbers = #tpu.dot_dimension_numbers<[1], [0], [0], [1], [0, 0, 1, 1], [], []>} : vector<4x4xbf16>, vector<4x128xbf16>, vector<4x128xf32> -> vector<4x128xf32>
    %38 = arith.truncf %37 : vector<4x128xf32> to vector<4x128xbf16>
    %cst_27 = arith.constant dense<0.000000e+00> : vector<4x128xf32>
    %39 = tpu.matmul %32, %38, %cst_27 {dimension_numbers = #tpu.dot_dimension_numbers<[1], [0], [0], [1], [0, 0, 1, 1], [], []>} : vector<4x4xbf16>, vector<4x128xbf16>, vector<4x128xf32> -> vector<4x128xf32>
    %40 = vector.broadcast %35 : vector<4x1xf32> to vector<4x128xf32>
    %41 = arith.addf %36, %40 : vector<4x128xf32>
    %42 = arith.addf %41, %39 : vector<4x128xf32>
    %43 = arith.truncf %42 : vector<4x128xf32> to vector<4x128xbf16>
    %44 = math.tanh %37 : vector<4x128xf32>
    %45 = arith.truncf %44 : vector<4x128xf32> to vector<4x128xbf16>
    %c2 = arith.constant 2 : index
    %c0_28 = arith.constant 0 : index
    %c0_29 = arith.constant 0 : index
    %46 = vector.load %arg2[%c2, %c0_28, %c0_29] : memref<3x8x16xbf16, #tpu.memory_space<vmem>>, vector<1x8x16xbf16>
    %47 = vector.shape_cast %46 : vector<1x8x16xbf16> to vector<8x16xbf16>
    %48 = vector.extract_strided_slice %47 {offsets = [0, 0], sizes = [8, 4], strides = [1, 1]} : vector<8x16xbf16> to vector<8x4xbf16>
    %c2_30 = arith.constant 2 : index
    %c0_31 = arith.constant 0 : index
    %c0_32 = arith.constant 0 : index
    %49 = vector.load %arg4[%c2_30, %c0_31, %c0_32] : memref<3x4x16xbf16, #tpu.memory_space<vmem>>, vector<1x4x16xbf16>
    %50 = vector.shape_cast %49 : vector<1x4x16xbf16> to vector<4x16xbf16>
    %51 = vector.extract_strided_slice %50 {offsets = [0, 0], sizes = [4, 4], strides = [1, 1]} : vector<4x16xbf16> to vector<4x4xbf16>
    %c2_33 = arith.constant 2 : index
    %c0_34 = arith.constant 0 : index
    %c0_35 = arith.constant 0 : index
    %52 = vector.load %arg5[%c2_33, %c0_34, %c0_35] : memref<3x8x4xbf16, #tpu.memory_space<vmem>>, vector<1x8x4xbf16>
    %53 = vector.shape_cast %52 : vector<1x8x4xbf16> to vector<8x4xbf16>
    %c2_36 = arith.constant 2 : index
    %c0_37 = arith.constant 0 : index
    %c0_38 = arith.constant 0 : index
    %54 = vector.load %arg3[%c2_36, %c0_37, %c0_38] : memref<3x8x1xf32, #tpu.memory_space<vmem>>, vector<1x8x1xf32>
    %55 = vector.shape_cast %54 : vector<1x8x1xf32> to vector<8x1xf32>
    %cst_39 = arith.constant dense<0.000000e+00> : vector<8x128xf32>
    %56 = tpu.matmul %48, %43, %cst_39 {dimension_numbers = #tpu.dot_dimension_numbers<[1], [0], [0], [1], [0, 0, 1, 1], [], []>} : vector<8x4xbf16>, vector<4x128xbf16>, vector<8x128xf32> -> vector<8x128xf32>
    %cst_40 = arith.constant dense<0.000000e+00> : vector<4x128xf32>
    %57 = tpu.matmul %51, %45, %cst_40 {dimension_numbers = #tpu.dot_dimension_numbers<[1], [0], [0], [1], [0, 0, 1, 1], [], []>} : vector<4x4xbf16>, vector<4x128xbf16>, vector<4x128xf32> -> vector<4x128xf32>
    %58 = arith.truncf %57 : vector<4x128xf32> to vector<4x128xbf16>
    %cst_41 = arith.constant dense<0.000000e+00> : vector<8x128xf32>
    %59 = tpu.matmul %53, %58, %cst_41 {dimension_numbers = #tpu.dot_dimension_numbers<[1], [0], [0], [1], [0, 0, 1, 1], [], []>} : vector<8x4xbf16>, vector<4x128xbf16>, vector<8x128xf32> -> vector<8x128xf32>
    %60 = vector.broadcast %55 : vector<8x1xf32> to vector<8x128xf32>
    %61 = arith.addf %56, %60 : vector<8x128xf32>
    %62 = arith.addf %61, %59 : vector<8x128xf32>
    %c0_42 = arith.constant 0 : index
    %c0_43 = arith.constant 0 : index
    %63 = vector.load %arg6[%c0_42, %c0_43] : memref<8x128xf32, #tpu.memory_space<vmem>>, vector<8x128xf32>
    tpu.vector_store %arg6[%c0_42, %c0_43], %62 {strides = array<i32>} : memref<8x128xf32, #tpu.memory_space<vmem>>, vector<8x128xf32>,
    return
  }
  func.func @transform_0(%arg0: i32) -> (i32, i32) {
    %c0_i32 = arith.constant 0 : i32
    %c0_i32_0 = arith.constant 0 : i32
    return %c0_i32, %arg0 : i32, i32
  }
  func.func @transform_1(%arg0: i32) -> (i32, i32, i32) {
    %c0_i32 = arith.constant 0 : i32
    %c0_i32_0 = arith.constant 0 : i32
    %c0_i32_1 = arith.constant 0 : i32
    %c0_i32_2 = arith.constant 0 : i32
    return %c0_i32, %c0_i32_0, %c0_i32_1 : i32, i32, i32
  }
  func.func @transform_2(%arg0: i32) -> (i32, i32, i32) {
    %c0_i32 = arith.constant 0 : i32
    %c0_i32_0 = arith.constant 0 : i32
    %c0_i32_1 = arith.constant 0 : i32
    %c0_i32_2 = arith.constant 0 : i32
    return %c0_i32, %c0_i32_0, %c0_i32_1 : i32, i32, i32
  }
  func.func @transform_3(%arg0: i32) -> (i32, i32, i32) {
    %c0_i32 = arith.constant 0 : i32
    %c0_i32_0 = arith.constant 0 : i32
    %c0_i32_1 = arith.constant 0 : i32
    %c0_i32_2 = arith.constant 0 : i32
    return %c0_i32, %c0_i32_0, %c0_i32_1 : i32, i32, i32
  }
  func.func @transform_4(%arg0: i32) -> (i32, i32, i32) {
    %c0_i32 = arith.constant 0 : i32
    %c0_i32_0 = arith.constant 0 : i32
    %c0_i32_1 = arith.constant 0 : i32
    %c0_i32_2 = arith.constant 0 : i32
    return %c0_i32, %c0_i32_0, %c0_i32_1 : i32, i32, i32
  }
  func.func @transform_5(%arg0: i32) -> (i32, i32) {
    %c0_i32 = arith.constant 0 : i32
    %c0_i32_0 = arith.constant 0 : i32
    return %c0_i32, %arg0 : i32, i32
  }
}

module attributes {stable_mosaic.version = 11 : i64} {
  func.func @kernel(%arg0: i32, %arg1: memref<16x128xbf16, #tpu.memory_space<vmem>>, %arg2: memref<3x8x16xbf16, #tpu.memory_space<vmem>>, %arg3: memref<3x8x1xf32, #tpu.memory_space<vmem>>, %arg4: memref<3x4x16xbf16, #tpu.memory_space<vmem>>, %arg5: memref<3x8x4xbf16, #tpu.memory_space<vmem>>, %arg6: memref<8x128xf32, #tpu.memory_space<vmem>>) attributes {dimension_semantics = [#tpu.dimension_semantics<parallel>], iteration_bounds = array<i64: 1>, scalar_prefetch = 0 : i64, scratch_operands = 0 : i64, tpu.core_type = #tpu.core_type<tc>, window_params = [{transform_indices = @transform_0, window_bounds = array<i64: 16, 128>}, {pipeline_mode = #tpu.pipeline_mode<synchronous>, transform_indices = @transform_1, window_bounds = array<i64: 3, 8, 16>}, {pipeline_mode = #tpu.pipeline_mode<synchronous>, transform_indices = @transform_2, window_bounds = array<i64: 3, 8, 1>}, {pipeline_mode = #tpu.pipeline_mode<synchronous>, transform_indices = @transform_3, window_bounds = array<i64: 3, 4, 16>}, {pipeline_mode = #tpu.pipeline_mode<synchronous>, transform_indices = @transform_4, window_bounds = array<i64: 3, 8, 4>}, {transform_indices = @transform_5, window_bounds = array<i64: 8, 128>}]} {
    %c0 = arith.constant 0 : index
    %c0_0 = arith.constant 0 : index
    %0 = vector.load %arg1[%c0, %c0_0] : memref<16x128xbf16, #tpu.memory_space<vmem>>, vector<16x128xbf16>
    %c0_1 = arith.constant 0 : index
    %c0_2 = arith.constant 0 : index
    %c0_3 = arith.constant 0 : index
    %1 = vector.load %arg2[%c0_1, %c0_2, %c0_3] : memref<3x8x16xbf16, #tpu.memory_space<vmem>>, vector<1x8x16xbf16>
    %2 = vector.shape_cast %1 : vector<1x8x16xbf16> to vector<8x16xbf16>
    %3 = vector.extract_strided_slice %2 {offsets = [0, 0], sizes = [4, 16], strides = [1, 1]} : vector<8x16xbf16> to vector<4x16xbf16>
    %c0_4 = arith.constant 0 : index
    %c0_5 = arith.constant 0 : index
    %c0_6 = arith.constant 0 : index
    %4 = vector.load %arg4[%c0_4, %c0_5, %c0_6] : memref<3x4x16xbf16, #tpu.memory_space<vmem>>, vector<1x4x16xbf16>
    %5 = vector.shape_cast %4 : vector<1x4x16xbf16> to vector<4x16xbf16>
    %c0_7 = arith.constant 0 : index
    %c0_8 = arith.constant 0 : index
    %c0_9 = arith.constant 0 : index
    %6 = vector.load %arg5[%c0_7, %c0_8, %c0_9] : memref<3x8x4xbf16, #tpu.memory_space<vmem>>, vector<1x8x4xbf16>
    %7 = vector.shape_cast %6 : vector<1x8x4xbf16> to vector<8x4xbf16>
    %8 = vector.extract_strided_slice %7 {offsets = [0, 0], sizes = [4, 4], strides = [1, 1]} : vector<8x4xbf16> to vector<4x4xbf16>
    %c0_10 = arith.constant 0 : index
    %c0_11 = arith.constant 0 : index
    %c0_12 = arith.constant 0 : index
    %9 = vector.load %arg3[%c0_10, %c0_11, %c0_12] : memref<3x8x1xf32, #tpu.memory_space<vmem>>, vector<1x8x1xf32>
    %10 = vector.shape_cast %9 : vector<1x8x1xf32> to vector<8x1xf32>
    %11 = vector.extract_strided_slice %10 {offsets = [0, 0], sizes = [4, 1], strides = [1, 1]} : vector<8x1xf32> to vector<4x1xf32>
    %12 = tpu.concatenate %3, %5 in 0 : vector<4x16xbf16>, vector<4x16xbf16> -> vector<8x16xbf16>
    %cst = arith.constant dense<0.000000e+00> : vector<8x128xf32>
    %13 = tpu.matmul %12, %0, %cst {dimension_numbers = #tpu.dot_dimension_numbers<[1], [0], [0], [1], [0, 0, 1, 1], [], []>} : vector<8x16xbf16>, vector<16x128xbf16>, vector<8x128xf32> -> vector<8x128xf32>
    %14 = vector.extract_strided_slice %13 {offsets = [0, 0], sizes = [4, 128], strides = [1, 1]} : vector<8x128xf32> to vector<4x128xf32>
    %15 = vector.extract_strided_slice %13 {offsets = [4, 0], sizes = [4, 128], strides = [1, 1]} : vector<8x128xf32> to vector<4x128xf32>
    %16 = arith.truncf %15 : vector<4x128xf32> to vector<4x128xbf16>
    %cst_13 = arith.constant dense<0.000000e+00> : vector<4x128xf32>
    %17 = tpu.matmul %8, %16, %cst_13 {dimension_numbers = #tpu.dot_dimension_numbers<[1], [0], [0], [1], [0, 0, 1, 1], [], []>} : vector<4x4xbf16>, vector<4x128xbf16>, vector<4x128xf32> -> vector<4x128xf32>
    %18 = vector.broadcast %11 : vector<4x1xf32> to vector<4x128xf32>
    %19 = arith.addf %14, %18 : vector<4x128xf32>
    %20 = arith.addf %19, %17 : vector<4x128xf32>
    %21 = arith.truncf %20 : vector<4x128xf32> to vector<4x128xbf16>
    %22 = math.tanh %15 : vector<4x128xf32>
    %23 = arith.truncf %22 : vector<4x128xf32> to vector<4x128xbf16>
    %c1 = arith.constant 1 : index
    %c0_14 = arith.constant 0 : index
    %c0_15 = arith.constant 0 : index
    %24 = vector.load %arg2[%c1, %c0_14, %c0_15] : memref<3x8x16xbf16, #tpu.memory_space<vmem>>, vector<1x8x16xbf16>
    %25 = vector.shape_cast %24 : vector<1x8x16xbf16> to vector<8x16xbf16>
    %26 = vector.extract_strided_slice %25 {offsets = [0, 0], sizes = [4, 4], strides = [1, 1]} : vector<8x16xbf16> to vector<4x4xbf16>
    %c1_16 = arith.constant 1 : index
    %c0_17 = arith.constant 0 : index
    %c0_18 = arith.constant 0 : index
    %27 = vector.load %arg4[%c1_16, %c0_17, %c0_18] : memref<3x4x16xbf16, #tpu.memory_space<vmem>>, vector<1x4x16xbf16>
    %28 = vector.shape_cast %27 : vector<1x4x16xbf16> to vector<4x16xbf16>
    %29 = vector.extract_strided_slice %28 {offsets = [0, 0], sizes = [4, 4], strides = [1, 1]} : vector<4x16xbf16> to vector<4x4xbf16>
    %c1_19 = arith.constant 1 : index
    %c0_20 = arith.constant 0 : index
    %c0_21 = arith.constant 0 : index
    %30 = vector.load %arg5[%c1_19, %c0_20, %c0_21] : memref<3x8x4xbf16, #tpu.memory_space<vmem>>, vector<1x8x4xbf16>
    %31 = vector.shape_cast %30 : vector<1x8x4xbf16> to vector<8x4xbf16>
    %32 = vector.extract_strided_slice %31 {offsets = [0, 0], sizes = [4, 4], strides = [1, 1]} : vector<8x4xbf16> to vector<4x4xbf16>
    %c1_22 = arith.constant 1 : index
    %c0_23 = arith.constant 0 : index
    %c0_24 = arith.constant 0 : index
    %33 = vector.load %arg3[%c1_22, %c0_23, %c0_24] : memref<3x8x1xf32, #tpu.memory_space<vmem>>, vector<1x8x1xf32>
    %34 = vector.shape_cast %33 : vector<1x8x1xf32> to vector<8x1xf32>
    %35 = vector.extract_strided_slice %34 {offsets = [0, 0], sizes = [4, 1], strides = [1, 1]} : vector<8x1xf32> to vector<4x1xf32>
    %cst_25 = arith.constant dense<0.000000e+00> : vector<4x128xf32>
    %36 = tpu.matmul %26, %21, %cst_25 {dimension_numbers = #tpu.dot_dimension_numbers<[1], [0], [0], [1], [0, 0, 1, 1], [], []>} : vector<4x4xbf16>, vector<4x128xbf16>, vector<4x128xf32> -> vector<4x128xf32>
    %cst_26 = arith.constant dense<0.000000e+00> : vector<4x128xf32>
    %37 = tpu.matmul %29, %23, %cst_26 {dimension_numbers = #tpu.dot_dimension_numbers<[1], [0], [0], [1], [0, 0, 1, 1], [], []>} : vector<4x4xbf16>, vector<4x128xbf16>, vector<4x128xf32> -> vector<4x128xf32>
    %38 = arith.truncf %37 : vector<4x128xf32> to vector<4x128xbf16>
    %cst_27 = arith.constant dense<0.000000e+00> : vector<4x128xf32>
    %39 = tpu.matmul %32, %38, %cst_27 {dimension_numbers = #tpu.dot_dimension_numbers<[1], [0], [0], [1], [0, 0, 1, 1], [], []>} : vector<4x4xbf16>, vector<4x128xbf16>, vector<4x128xf32> -> vector<4x128xf32>
    %40 = vector.broadcast %35 : vector<4x1xf32> to vector<4x128xf32>
    %41 = arith.addf %36, %40 : vector<4x128xf32>
    %42 = arith.addf %41, %39 : vector<4x128xf32>
    %43 = arith.truncf %42 : vector<4x128xf32> to vector<4x128xbf16>
    %44 = math.tanh %37 : vector<4x128xf32>
    %45 = arith.truncf %44 : vector<4x128xf32> to vector<4x128xbf16>
    %c2 = arith.constant 2 : index
    %c0_28 = arith.constant 0 : index
    %c0_29 = arith.constant 0 : index
    %46 = vector.load %arg2[%c2, %c0_28, %c0_29] : memref<3x8x16xbf16, #tpu.memory_space<vmem>>, vector<1x8x16xbf16>
    %47 = vector.shape_cast %46 : vector<1x8x16xbf16> to vector<8x16xbf16>
    %48 = vector.extract_strided_slice %47 {offsets = [0, 0], sizes = [8, 4], strides = [1, 1]} : vector<8x16xbf16> to vector<8x4xbf16>
    %c2_30 = arith.constant 2 : index
    %c0_31 = arith.constant 0 : index
    %c0_32 = arith.constant 0 : index
    %49 = vector.load %arg4[%c2_30, %c0_31, %c0_32] : memref<3x4x16xbf16, #tpu.memory_space<vmem>>, vector<1x4x16xbf16>
    %50 = vector.shape_cast %49 : vector<1x4x16xbf16> to vector<4x16xbf16>
    %51 = vector.extract_strided_slice %50 {offsets = [0, 0], sizes = [4, 4], strides = [1, 1]} : vector<4x16xbf16> to vector<4x4xbf16>
    %c2_33 = arith.constant 2 : index
    %c0_34 = arith.constant 0 : index
    %c0_35 = arith.constant 0 : index
    %52 = vector.load %arg5[%c2_33, %c0_34, %c0_35] : memref<3x8x4xbf16, #tpu.memory_space<vmem>>, vector<1x8x4xbf16>
    %53 = vector.shape_cast %52 : vector<1x8x4xbf16> to vector<8x4xbf16>
    %c2_36 = arith.constant 2 : index
    %c0_37 = arith.constant 0 : index
    %c0_38 = arith.constant 0 : index
    %54 = vector.load %arg3[%c2_36, %c0_37, %c0_38] : memref<3x8x1xf32, #tpu.memory_space<vmem>>, vector<1x8x1xf32>
    %55 = vector.shape_cast %54 : vector<1x8x1xf32> to vector<8x1xf32>
    %cst_39 = arith.constant dense<0.000000e+00> : vector<8x128xf32>
    %56 = tpu.matmul %48, %43, %cst_39 {dimension_numbers = #tpu.dot_dimension_numbers<[1], [0], [0], [1], [0, 0, 1, 1], [], []>} : vector<8x4xbf16>, vector<4x128xbf16>, vector<8x128xf32> -> vector<8x128xf32>
    %cst_40 = arith.constant dense<0.000000e+00> : vector<4x128xf32>
    %57 = tpu.matmul %51, %45, %cst_40 {dimension_numbers = #tpu.dot_dimension_numbers<[1], [0], [0], [1], [0, 0, 1, 1], [], []>} : vector<4x4xbf16>, vector<4x128xbf16>, vector<4x128xf32> -> vector<4x128xf32>
    %58 = arith.truncf %57 : vector<4x128xf32> to vector<4x128xbf16>
    %cst_41 = arith.constant dense<0.000000e+00> : vector<8x128xf32>
    %59 = tpu.matmul %53, %58, %cst_41 {dimension_numbers = #tpu.dot_dimension_numbers<[1], [0], [0], [1], [0, 0, 1, 1], [], []>} : vector<8x4xbf16>, vector<4x128xbf16>, vector<8x128xf32> -> vector<8x128xf32>
    %60 = vector.broadcast %55 : vector<8x1xf32> to vector<8x128xf32>
    %61 = arith.addf %56, %60 : vector<8x128xf32>
    %62 = arith.addf %61, %59 : vector<8x128xf32>
    %c0_42 = arith.constant 0 : index
    %c0_43 = arith.constant 0 : index
    %63 = vector.load %arg6[%c0_42, %c0_43] : memref<8x128xf32, #tpu.memory_space<vmem>>, vector<8x128xf32>
    tpu.vector_store %arg6[%c0_42, %c0_43], %62 {strides = array<i32>} : memref<8x128xf32, #tpu.memory_space<vmem>>, vector<8x128xf32>,
    return
  }
  func.func @transform_0(%arg0: i32) -> (i32, i32) {
    %c0_i32 = arith.constant 0 : i32
    %c0_i32_0 = arith.constant 0 : i32
    return %c0_i32, %arg0 : i32, i32
  }
  func.func @transform_1(%arg0: i32) -> (i32, i32, i32) {
    %c0_i32 = arith.constant 0 : i32
    %c0_i32_0 = arith.constant 0 : i32
    %c0_i32_1 = arith.constant 0 : i32
    %c0_i32_2 = arith.constant 0 : i32
    return %c0_i32, %c0_i32_0, %c0_i32_1 : i32, i32, i32
  }
  func.func @transform_2(%arg0: i32) -> (i32, i32, i32) {
    %c0_i32 = arith.constant 0 : i32
    %c0_i32_0 = arith.constant 0 : i32
    %c0_i32_1 = arith.constant 0 : i32
    %c0_i32_2 = arith.constant 0 : i32
    return %c0_i32, %c0_i32_0, %c0_i32_1 : i32, i32, i32
  }
  func.func @transform_3(%arg0: i32) -> (i32, i32, i32) {
    %c0_i32 = arith.constant 0 : i32
    %c0_i32_0 = arith.constant 0 : i32
    %c0_i32_1 = arith.constant 0 : i32
    %c0_i32_2 = arith.constant 0 : i32
    return %c0_i32, %c0_i32_0, %c0_i32_1 : i32, i32, i32
  }
  func.func @transform_4(%arg0: i32) -> (i32, i32, i32) {
    %c0_i32 = arith.constant 0 : i32
    %c0_i32_0 = arith.constant 0 : i32
    %c0_i32_1 = arith.constant 0 : i32
    %c0_i32_2 = arith.constant 0 : i32
    return %c0_i32, %c0_i32_0, %c0_i32_1 : i32, i32, i32
  }
  func.func @transform_5(%arg0: i32) -> (i32, i32) {
    %c0_i32 = arith.constant 0 : i32
    %c0_i32_0 = arith.constant 0 : i32
    return %c0_i32, %arg0 : i32, i32
  }
}

</mosaic_0001>

<llo_original>
// kernel: tpu_custom_call.1
$region0: #{tpu_custom_call.1}
  #allocation0 [shape = 'u32[]', space=smem, size = 0x4, offset = 0x4, fixed_abs, tag = 'smem constant byte address 0x4 - core index']
  #allocation1 [shape = 'u32[144,128]{1,0:T(1,128)}', space=vmem, size = 0x12000, scoped, tag = 'internal scratch']
  %s0 = inlined_call_operand.vmem [shape: bf16[16,128], index: 0, kind: input, shape index: {}]
  %s1 = inlined_call_operand.vmem [shape: bf16[3,8,16], index: 1, kind: input, shape index: {}]
  %s2 = inlined_call_operand.vmem [shape: f32[3,8,1], index: 2, kind: input, shape index: {}]
  %s3 = inlined_call_operand.vmem [shape: bf16[3,4,16], index: 3, kind: input, shape index: {}]
  %s4 = inlined_call_operand.vmem [shape: bf16[3,8,4], index: 4, kind: input, shape index: {}]
  %s5 = inlined_call_operand.hbm [shape: f32[8,128], index: 5, kind: output, shape index: {}]
  %s6 = sld [smem:[#allocation0]]
  $region30: #{tpu_custom_call.1} parent=0
    _
  %s8 = ssub.s32 1, %s6
  %s9 = scalar_select 0, %s8, %s6
  $region1: #{tpu_custom_call.1} parent=0
    #allocation2 [shape = 'u8[4096]{0}', space=vmem, size = 0x1000, scoped, tag = 'output window, operand 0, single buffered']
    #allocation3 [shape = 's32[1]{0}', space=sflag, size = 0x4, scoped, tag = 'scoped memory for tpu_custom_call.1']
    %10 = vsyncpa [#allocation3], 0
    // Predicated region
    $region2: #{tpu_custom_call.1} parent=1 // pred_check
      _
    $region3: #{tpu_custom_call.1} parent=1 // pred_check_branch
      %12 = sbr.rel (0) target = $region5
    $region4: #{tpu_custom_call.1} parent=1 // pred_region
      _
    $region5: #{tpu_custom_call.1} parent=1 // pred_fallthru
      _
    // Predicated region
    $region6: #{tpu_custom_call.1} parent=1 // pred_check
      _
    $region7: #{tpu_custom_call.1} parent=1 // pred_check_branch
      %14 = sbr.rel (0) target = $region9
    $region8: #{tpu_custom_call.1} parent=1 // pred_region
      _
    $region9: #{tpu_custom_call.1} parent=1 // pred_fallthru
      _
    // Predicated region
    $region10: #{tpu_custom_call.1} parent=1 // pred_check
      _
    $region11: #{tpu_custom_call.1} parent=1 // pred_check_branch
      %16 = sbr.rel (0) target = $region13
    $region12: #{tpu_custom_call.1} parent=1 // pred_region
      _
    $region13: #{tpu_custom_call.1} parent=1 // pred_fallthru
      _
    // Predicated region
    $region14: #{tpu_custom_call.1} parent=1 // pred_check
      _
    $region15: #{tpu_custom_call.1} parent=1 // pred_check_branch
      %18 = sbr.rel (0) target = $region17
    $region16: #{tpu_custom_call.1} parent=1 // pred_region
      _
    $region17: #{tpu_custom_call.1} parent=1 // pred_fallthru
      _
    // Predicated region
    $region18: #{tpu_custom_call.1} parent=1 // pred_check
      _
    $region19: #{tpu_custom_call.1} parent=1 // pred_check_branch
      %20 = sbr.rel (0) target = $region21
    $region20: #{tpu_custom_call.1} parent=1 // pred_region
      _
    $region21: #{tpu_custom_call.1} parent=1 // pred_fallthru
      _
    %v22 = vld [vmem:[%s0] sm:$0xf]
    %v23 = vld [vmem:[%s0 + $0x4] sm:$0xf]
    %v24 = vld [vmem:[%s1] sm:$0xf]
    %v25 = vld [vmem:[%s3] sm:$0x3]
    %v26 = vld [vmem:[%s4] sm:$0xf]
    %v27 = vld [vmem:[%s2] sm:$0xff]
    %v29 = vcombine.low %v25, %v25
    %v31 = vunpack.c.l.s4 1983009808
    %v32 = vunpack.c.0.s8 %v31
    %v33 = vlaneseq
    %v34 = vshrl.u32 %v33, 7
    %v35 = vsub.s32 %v32, %v34
    %v36 = vrot.slane %v29, %v35
    %vm37 = vcmask 1041408
    %v40 = vsel %vm37, %v24, %v36
    %v43 = vunpack.c.l.b16 %v22
    %v44 = vunpack.c.l.b16 %v23
    %v45 = vpack.c.b16 %v44, %v43
    %vm47 = vcmask 130048
    %v48 = vsel %vm47, %v40, 0
    %50 = vmatprep.subr.bf16.mxu0 0
    %51 = vmatpush1.bf16.msra.mxu0 %v45
    %52 = vmatprep.subr.bf16.mxu0 0
    %53 = vmatpush1.bf16.msra.mxu0 0
    %54 = vmatprep.subr.bf16.mxu0 0
    %55 = vmatpush1.bf16.msra.mxu0 0
    %56 = vmatprep.subr.bf16.mxu0 0
    %57 = vmatpush1.bf16.msra.mxu0 0
    %58 = vmatprep.subr.bf16.mxu0 0
    %59 = vmatpush1.bf16.msra.mxu0 0
    %60 = vmatprep.subr.bf16.mxu0 0
    %61 = vmatpush1.bf16.msra.mxu0 0
    %62 = vmatprep.subr.bf16.mxu0 0
    %63 = vmatpush1.bf16.msra.mxu0 0
    %64 = vmatprep.subr.bf16.mxu0 0
    %65 = vmatpush1.bf16.msra.mxu0 0
    %66 = vmatprep.subr.bf16.mxu0 0
    %67 = vmatpush1.bf16.msra.mxu0 0
    %68 = vmatprep.subr.bf16.mxu0 0
    %69 = vmatpush1.bf16.msra.mxu0 0
    %70 = vmatprep.subr.bf16.mxu0 0
    %71 = vmatpush1.bf16.msra.mxu0 0
    %72 = vmatprep.subr.bf16.mxu0 0
    %73 = vmatpush1.bf16.msra.mxu0 0
    %74 = vmatprep.subr.bf16.mxu0 0
    %75 = vmatpush1.bf16.msra.mxu0 0
    %76 = vmatprep.subr.bf16.mxu0 0
    %77 = vmatpush1.bf16.msra.mxu0 0
    %78 = vmatprep.subr.bf16.mxu0 0
    %79 = vmatpush1.bf16.msra.mxu0 0
    %80 = vmatprep.subr.bf16.mxu0 0
    %81 = vmatpush1.bf16.msra.mxu0 0
    %82 = vmatprep.mubr.bf16.mxu0 0
    %83 = vmatmul.mubr.bf16.gmra.mrb[0].mxu0 %v48
    %v84 = vpop.f32.mrb[0].mxu0
    %v85 = vadd.f32 0.0, %v84
    %v86 = vpop.f32.mrb[0].mxu0
    %v87 = vpop.f32.mrb[0].mxu0
    %v88 = vpop.f32.mrb[0].mxu0
    %89 = vdwg.mxu0
    %v90 = vpack.c.bf16 %v85, %v85
    %v92 = vrot.slane %v90, 2
    %vm93 = vcmask 31744
    %v95 = vsel %vm93, %v26, 0
    %v98 = vsel %vm37, %v92, 0
    %100 = vmatprep.subr.bf16.mxu0 0
    %101 = vmatpush1.bf16.msra.mxu0 %v98
    %102 = vmatprep.subr.bf16.mxu0 0
    %103 = vmatpush1.bf16.msra.mxu0 0
    %104 = vmatprep.subr.bf16.mxu0 0
    %105 = vmatpush1.bf16.msra.mxu0 0
    %106 = vmatprep.subr.bf16.mxu0 0
    %107 = vmatpush1.bf16.msra.mxu0 0
    %108 = vmatprep.subr.bf16.mxu0 0
    %109 = vmatpush1.bf16.msra.mxu0 0
    %110 = vmatprep.subr.bf16.mxu0 0
    %111 = vmatpush1.bf16.msra.mxu0 0
    %112 = vmatprep.subr.bf16.mxu0 0
    %113 = vmatpush1.bf16.msra.mxu0 0
    %114 = vmatprep.subr.bf16.mxu0 0
    %115 = vmatpush1.bf16.msra.mxu0 0
    %116 = vmatprep.subr.bf16.mxu0 0
    %117 = vmatpush1.bf16.msra.mxu0 0
    %118 = vmatprep.subr.bf16.mxu0 0
    %119 = vmatpush1.bf16.msra.mxu0 0
    %120 = vmatprep.subr.bf16.mxu0 0
    %121 = vmatpush1.bf16.msra.mxu0 0
    %122 = vmatprep.subr.bf16.mxu0 0
    %123 = vmatpush1.bf16.msra.mxu0 0
    %124 = vmatprep.subr.bf16.mxu0 0
    %125 = vmatpush1.bf16.msra.mxu0 0
    %126 = vmatprep.subr.bf16.mxu0 0
    %127 = vmatpush1.bf16.msra.mxu0 0
    %128 = vmatprep.subr.bf16.mxu0 0
    %129 = vmatpush1.bf16.msra.mxu0 0
    %130 = vmatprep.subr.bf16.mxu0 0
    %131 = vmatpush1.bf16.msra.mxu0 0
    %132 = vmatprep.mubr.bf16.mxu0 0
    %133 = vmatmul.mubr.bf16.gmra.mrb[0].mxu0 %v95
    %v134 = vpop.f32.mrb[0].mxu0
    %v135 = vadd.f32 0.0, %v134
    %v136 = vpop.f32.mrb[0].mxu0
    %v137 = vpop.f32.mrb[0].mxu0
    %v138 = vpop.f32.mrb[0].mxu0
    %139 = vdwg.mxu0
    %141 = vset.pattern.permute.xlu0 0
    %142 = vperm.xlu0 %141, %v27
    %v143 = vpop.permute.xlu0 %142
    %v145 = vadd.f32 %v85, %v143
    %v146 = vadd.f32 %v145, %v135
    %v147 = vpack.c.bf16 %v146, %v146
    %v148 = vtanh.pop %v85
    %v149 = vpack.c.bf16 %v148, %v148
    %s150 = scalar_lea.vmem %s1, 4
    %v151 = vld [vmem:[%s150] sm:$0xf]
    %s152 = scalar_lea.vmem %s3, 2
    %v153 = vld [vmem:[%s152] sm:$0x3]
    %s154 = scalar_lea.vmem %s4, 4
    %v155 = vld [vmem:[%s154] sm:$0xf]
    %s156 = scalar_lea.vmem %s2, 8
    %v157 = vld [vmem:[%s156] sm:$0xff]
    %v159 = vrot.slane %v149, 2
    %v161 = vsel %vm93, %v153, 0
    %v164 = vsel %vm37, %v159, 0
    %166 = vmatprep.subr.bf16.mxu0 0
    %167 = vmatpush1.bf16.msra.mxu0 %v164
    %168 = vmatprep.subr.bf16.mxu0 0
    %169 = vmatpush1.bf16.msra.mxu0 0
    %170 = vmatprep.subr.bf16.mxu0 0
    %171 = vmatpush1.bf16.msra.mxu0 0
    %172 = vmatprep.subr.bf16.mxu0 0
    %173 = vmatpush1.bf16.msra.mxu0 0
    %174 = vmatprep.subr.bf16.mxu0 0
    %175 = vmatpush1.bf16.msra.mxu0 0
    %176 = vmatprep.subr.bf16.mxu0 0
    %177 = vmatpush1.bf16.msra.mxu0 0
    %178 = vmatprep.subr.bf16.mxu0 0
    %179 = vmatpush1.bf16.msra.mxu0 0
    %180 = vmatprep.subr.bf16.mxu0 0
    %181 = vmatpush1.bf16.msra.mxu0 0
    %182 = vmatprep.subr.bf16.mxu0 0
    %183 = vmatpush1.bf16.msra.mxu0 0
    %184 = vmatprep.subr.bf16.mxu0 0
    %185 = vmatpush1.bf16.msra.mxu0 0
    %186 = vmatprep.subr.bf16.mxu0 0
    %187 = vmatpush1.bf16.msra.mxu0 0
    %188 = vmatprep.subr.bf16.mxu0 0
    %189 = vmatpush1.bf16.msra.mxu0 0
    %190 = vmatprep.subr.bf16.mxu0 0
    %191 = vmatpush1.bf16.msra.mxu0 0
    %192 = vmatprep.subr.bf16.mxu0 0
    %193 = vmatpush1.bf16.msra.mxu0 0
    %194 = vmatprep.subr.bf16.mxu0 0
    %195 = vmatpush1.bf16.msra.mxu0 0
    %196 = vmatprep.subr.bf16.mxu0 0
    %197 = vmatpush1.bf16.msra.mxu0 0
    %198 = vmatprep.mubr.bf16.mxu0 0
    %199 = vmatmul.mubr.bf16.gmra.mrb[0].mxu0 %v161
    %v200 = vpop.f32.mrb[0].mxu0
    %v201 = vadd.f32 0.0, %v200
    %v202 = vpop.f32.mrb[0].mxu0
    %v203 = vpop.f32.mrb[0].mxu0
    %v204 = vpop.f32.mrb[0].mxu0
    %205 = vdwg.mxu0
    %v206 = vpack.c.bf16 %v201, %v201
    %v208 = vsel %vm93, %v155, 0
    %v211 = vsel %vm37, %v206, 0
    %213 = vmatprep.subr.bf16.mxu0 0
    %214 = vmatpush1.bf16.msra.mxu0 %v211
    %215 = vmatprep.subr.bf16.mxu0 0
    %216 = vmatpush1.bf16.msra.mxu0 0
    %217 = vmatprep.subr.bf16.mxu0 0
    %218 = vmatpush1.bf16.msra.mxu0 0
    %219 = vmatprep.subr.bf16.mxu0 0
    %220 = vmatpush1.bf16.msra.mxu0 0
    %221 = vmatprep.subr.bf16.mxu0 0
    %222 = vmatpush1.bf16.msra.mxu0 0
    %223 = vmatprep.subr.bf16.mxu0 0
    %224 = vmatpush1.bf16.msra.mxu0 0
    %225 = vmatprep.subr.bf16.mxu0 0
    %226 = vmatpush1.bf16.msra.mxu0 0
    %227 = vmatprep.subr.bf16.mxu0 0
    %228 = vmatpush1.bf16.msra.mxu0 0
    %229 = vmatprep.subr.bf16.mxu0 0
    %230 = vmatpush1.bf16.msra.mxu0 0
    %231 = vmatprep.subr.bf16.mxu0 0
    %232 = vmatpush1.bf16.msra.mxu0 0
    %233 = vmatprep.subr.bf16.mxu0 0
    %234 = vmatpush1.bf16.msra.mxu0 0
    %235 = vmatprep.subr.bf16.mxu0 0
    %236 = vmatpush1.bf16.msra.mxu0 0
    %237 = vmatprep.subr.bf16.mxu0 0
    %238 = vmatpush1.bf16.msra.mxu0 0
    %239 = vmatprep.subr.bf16.mxu0 0
    %240 = vmatpush1.bf16.msra.mxu0 0
    %241 = vmatprep.subr.bf16.mxu0 0
    %242 = vmatpush1.bf16.msra.mxu0 0
    %243 = vmatprep.subr.bf16.mxu0 0
    %244 = vmatpush1.bf16.msra.mxu0 0
    %245 = vmatprep.mubr.bf16.mxu0 0
    %246 = vmatmul.mubr.bf16.gmra.mrb[0].mxu0 %v208
    %v247 = vpop.f32.mrb[0].mxu0
    %v248 = vadd.f32 0.0, %v247
    %v249 = vpop.f32.mrb[0].mxu0
    %v250 = vpop.f32.mrb[0].mxu0
    %v251 = vpop.f32.mrb[0].mxu0
    %252 = vdwg.mxu0
    %254 = vset.pattern.permute.xlu0 0
    %255 = vperm.xlu0 %254, %v157
    %v256 = vpop.permute.xlu0 %255
    %v259 = vsel %vm93, %v151, 0
    %v262 = vsel %vm37, %v147, 0
    %264 = vmatprep.subr.bf16.mxu0 0
    %265 = vmatpush1.bf16.msra.mxu0 %v262
    %266 = vmatprep.subr.bf16.mxu0 0
    %267 = vmatpush1.bf16.msra.mxu0 0
    %268 = vmatprep.subr.bf16.mxu0 0
    %269 = vmatpush1.bf16.msra.mxu0 0
    %270 = vmatprep.subr.bf16.mxu0 0
    %271 = vmatpush1.bf16.msra.mxu0 0
    %272 = vmatprep.subr.bf16.mxu0 0
    %273 = vmatpush1.bf16.msra.mxu0 0
    %274 = vmatprep.subr.bf16.mxu0 0
    %275 = vmatpush1.bf16.msra.mxu0 0
    %276 = vmatprep.subr.bf16.mxu0 0
    %277 = vmatpush1.bf16.msra.mxu0 0
    %278 = vmatprep.subr.bf16.mxu0 0
    %279 = vmatpush1.bf16.msra.mxu0 0
    %280 = vmatprep.subr.bf16.mxu0 0
    %281 = vmatpush1.bf16.msra.mxu0 0
    %282 = vmatprep.subr.bf16.mxu0 0
    %283 = vmatpush1.bf16.msra.mxu0 0
    %284 = vmatprep.subr.bf16.mxu0 0
    %285 = vmatpush1.bf16.msra.mxu0 0
    %286 = vmatprep.subr.bf16.mxu0 0
    %287 = vmatpush1.bf16.msra.mxu0 0
    %288 = vmatprep.subr.bf16.mxu0 0
    %289 = vmatpush1.bf16.msra.mxu0 0
    %290 = vmatprep.subr.bf16.mxu0 0
    %291 = vmatpush1.bf16.msra.mxu0 0
    %292 = vmatprep.subr.bf16.mxu0 0
    %293 = vmatpush1.bf16.msra.mxu0 0
    %294 = vmatprep.subr.bf16.mxu0 0
    %295 = vmatpush1.bf16.msra.mxu0 0
    %296 = vmatprep.mubr.bf16.mxu0 0
    %297 = vmatmul.mubr.bf16.gmra.mrb[0].mxu0 %v259
    %v298 = vpop.f32.mrb[0].mxu0
    %v299 = vadd.f32 %v256, %v298
    %v300 = vpop.f32.mrb[0].mxu0
    %v301 = vpop.f32.mrb[0].mxu0
    %v302 = vpop.f32.mrb[0].mxu0
    %303 = vdwg.mxu0
    %v304 = vadd.f32 %v299, %v248
    %v305 = vpack.c.bf16 %v304, %v304
    %v306 = vtanh.pop %v201
    %v307 = vpack.c.bf16 %v306, %v306
    %s308 = scalar_lea.vmem %s1, 8
    %v309 = vld [vmem:[%s308] sm:$0xf]
    %s310 = scalar_lea.vmem %s3, 4
    %v311 = vld [vmem:[%s310] sm:$0x3]
    %s312 = scalar_lea.vmem %s4, 8
    %v313 = vld [vmem:[%s312] sm:$0xf]
    %s314 = scalar_lea.vmem %s2, 16
    %v315 = vld [vmem:[%s314] sm:$0xff]
    %v317 = vsel %vm93, %v311, 0
    %v320 = vsel %vm37, %v307, 0
    %322 = vmatprep.subr.bf16.mxu0 0
    %323 = vmatpush1.bf16.msra.mxu0 %v320
    %324 = vmatprep.subr.bf16.mxu0 0
    %325 = vmatpush1.bf16.msra.mxu0 0
    %326 = vmatprep.subr.bf16.mxu0 0
    %327 = vmatpush1.bf16.msra.mxu0 0
    %328 = vmatprep.subr.bf16.mxu0 0
    %329 = vmatpush1.bf16.msra.mxu0 0
    %330 = vmatprep.subr.bf16.mxu0 0
    %331 = vmatpush1.bf16.msra.mxu0 0
    %332 = vmatprep.subr.bf16.mxu0 0
    %333 = vmatpush1.bf16.msra.mxu0 0
    %334 = vmatprep.subr.bf16.mxu0 0
    %335 = vmatpush1.bf16.msra.mxu0 0
    %336 = vmatprep.subr.bf16.mxu0 0
    %337 = vmatpush1.bf16.msra.mxu0 0
    %338 = vmatprep.subr.bf16.mxu0 0
    %339 = vmatpush1.bf16.msra.mxu0 0
    %340 = vmatprep.subr.bf16.mxu0 0
    %341 = vmatpush1.bf16.msra.mxu0 0
    %342 = vmatprep.subr.bf16.mxu0 0
    %343 = vmatpush1.bf16.msra.mxu0 0
    %344 = vmatprep.subr.bf16.mxu0 0
    %345 = vmatpush1.bf16.msra.mxu0 0
    %346 = vmatprep.subr.bf16.mxu0 0
    %347 = vmatpush1.bf16.msra.mxu0 0
    %348 = vmatprep.subr.bf16.mxu0 0
    %349 = vmatpush1.bf16.msra.mxu0 0
    %350 = vmatprep.subr.bf16.mxu0 0
    %351 = vmatpush1.bf16.msra.mxu0 0
    %352 = vmatprep.subr.bf16.mxu0 0
    %353 = vmatpush1.bf16.msra.mxu0 0
    %354 = vmatprep.mubr.bf16.mxu0 0
    %355 = vmatmul.mubr.bf16.gmra.mrb[0].mxu0 %v317
    %v356 = vpop.f32.mrb[0].mxu0
    %v357 = vadd.f32 0.0, %v356
    %v358 = vpop.f32.mrb[0].mxu0
    %v359 = vpop.f32.mrb[0].mxu0
    %v360 = vpop.f32.mrb[0].mxu0
    %361 = vdwg.mxu0
    %v362 = vpack.c.bf16 %v357, %v357
    %v364 = vsel %vm93, %v313, 0
    %v367 = vsel %vm37, %v362, 0
    %369 = vmatprep.subr.bf16.mxu0 0
    %370 = vmatpush1.bf16.msra.mxu0 %v367
    %371 = vmatprep.subr.bf16.mxu0 0
    %372 = vmatpush1.bf16.msra.mxu0 0
    %373 = vmatprep.subr.bf16.mxu0 0
    %374 = vmatpush1.bf16.msra.mxu0 0
    %375 = vmatprep.subr.bf16.mxu0 0
    %376 = vmatpush1.bf16.msra.mxu0 0
    %377 = vmatprep.subr.bf16.mxu0 0
    %378 = vmatpush1.bf16.msra.mxu0 0
    %379 = vmatprep.subr.bf16.mxu0 0
    %380 = vmatpush1.bf16.msra.mxu0 0
    %381 = vmatprep.subr.bf16.mxu0 0
    %382 = vmatpush1.bf16.msra.mxu0 0
    %383 = vmatprep.subr.bf16.mxu0 0
    %384 = vmatpush1.bf16.msra.mxu0 0
    %385 = vmatprep.subr.bf16.mxu0 0
    %386 = vmatpush1.bf16.msra.mxu0 0
    %387 = vmatprep.subr.bf16.mxu0 0
    %388 = vmatpush1.bf16.msra.mxu0 0
    %389 = vmatprep.subr.bf16.mxu0 0
    %390 = vmatpush1.bf16.msra.mxu0 0
    %391 = vmatprep.subr.bf16.mxu0 0
    %392 = vmatpush1.bf16.msra.mxu0 0
    %393 = vmatprep.subr.bf16.mxu0 0
    %394 = vmatpush1.bf16.msra.mxu0 0
    %395 = vmatprep.subr.bf16.mxu0 0
    %396 = vmatpush1.bf16.msra.mxu0 0
    %397 = vmatprep.subr.bf16.mxu0 0
    %398 = vmatpush1.bf16.msra.mxu0 0
    %399 = vmatprep.subr.bf16.mxu0 0
    %400 = vmatpush1.bf16.msra.mxu0 0
    %401 = vmatprep.mubr.bf16.mxu0 0
    %402 = vmatmul.mubr.bf16.gmra.mrb[0].mxu0 %v364
    %v403 = vpop.f32.mrb[0].mxu0
    %v404 = vadd.f32 0.0, %v403
    %v405 = vpop.f32.mrb[0].mxu0
    %v406 = vpop.f32.mrb[0].mxu0
    %v407 = vpop.f32.mrb[0].mxu0
    %408 = vdwg.mxu0
    %410 = vset.pattern.permute.xlu0 0
    %411 = vperm.xlu0 %410, %v315
    %v412 = vpop.permute.xlu0 %411
    %v415 = vsel %vm93, %v309, 0
    %v418 = vsel %vm37, %v305, 0
    %420 = vmatprep.subr.bf16.mxu0 0
    %421 = vmatpush1.bf16.msra.mxu0 %v418
    %422 = vmatprep.subr.bf16.mxu0 0
    %423 = vmatpush1.bf16.msra.mxu0 0
    %424 = vmatprep.subr.bf16.mxu0 0
    %425 = vmatpush1.bf16.msra.mxu0 0
    %426 = vmatprep.subr.bf16.mxu0 0
    %427 = vmatpush1.bf16.msra.mxu0 0
    %428 = vmatprep.subr.bf16.mxu0 0
    %429 = vmatpush1.bf16.msra.mxu0 0
    %430 = vmatprep.subr.bf16.mxu0 0
    %431 = vmatpush1.bf16.msra.mxu0 0
    %432 = vmatprep.subr.bf16.mxu0 0
    %433 = vmatpush1.bf16.msra.mxu0 0
    %434 = vmatprep.subr.bf16.mxu0 0
    %435 = vmatpush1.bf16.msra.mxu0 0
    %436 = vmatprep.subr.bf16.mxu0 0
    %437 = vmatpush1.bf16.msra.mxu0 0
    %438 = vmatprep.subr.bf16.mxu0 0
    %439 = vmatpush1.bf16.msra.mxu0 0
    %440 = vmatprep.subr.bf16.mxu0 0
    %441 = vmatpush1.bf16.msra.mxu0 0
    %442 = vmatprep.subr.bf16.mxu0 0
    %443 = vmatpush1.bf16.msra.mxu0 0
    %444 = vmatprep.subr.bf16.mxu0 0
    %445 = vmatpush1.bf16.msra.mxu0 0
    %446 = vmatprep.subr.bf16.mxu0 0
    %447 = vmatpush1.bf16.msra.mxu0 0
    %448 = vmatprep.subr.bf16.mxu0 0
    %449 = vmatpush1.bf16.msra.mxu0 0
    %450 = vmatprep.subr.bf16.mxu0 0
    %451 = vmatpush1.bf16.msra.mxu0 0
    %452 = vmatprep.mubr.bf16.mxu0 0
    %453 = vmatmul.mubr.bf16.gmra.mrb[0].mxu0 %v415
    %v454 = vpop.f32.mrb[0].mxu0
    %v455 = vadd.f32 %v412, %v454
    %v456 = vpop.f32.mrb[0].mxu0
    %v457 = vpop.f32.mrb[0].mxu0
    %v458 = vpop.f32.mrb[0].mxu0
    %459 = vdwg.mxu0
    %v460 = vadd.f32 %v455, %v404
    %461 = vst [vmem:[#allocation2] sm:$0xff] %v460
    // Predicated region
    $region22: #{tpu_custom_call.1} parent=1 // pred_check
      _
    $region23: #{tpu_custom_call.1} parent=1 // pred_check_branch
      %463 = sbr.rel (0) target = $region25
    $region24: #{tpu_custom_call.1} parent=1 // pred_region
      %s465 = ssub.s32 128, 128
      %466 = vsyncadd [#allocation3], %s465
      %s468 = sshll.u32 [#allocation2], 4
      %s469 = int_to_ptr.vmem [resolvable:$true] %s468
      %471 = dma.vmem_to_hbm [thread:$0]  %s469, 128, %s5, [#allocation3]
    $region25: #{tpu_custom_call.1} parent=1 // pred_fallthru
      _
    // Predicated region
    $region26: #{tpu_custom_call.1} parent=1 // pred_check
      _
    $region27: #{tpu_custom_call.1} parent=1 // pred_check_branch
      %473 = sbr.rel (0) target = $region29
    $region28: #{tpu_custom_call.1} parent=1 // pred_region
      %474 = dma.done [#allocation3], 128
    $region29: #{tpu_custom_call.1} parent=1 // pred_fallthru
      _
    %475 = vsyncpa [#allocation3], 1

// kernel: tpu_custom_call.1
$region0: #{tpu_custom_call.1}
  #allocation0 [shape = 'u32[]', space=smem, size = 0x4, offset = 0x4, fixed_abs, tag = 'smem constant byte address 0x4 - core index']
  #allocation1 [shape = 'u32[144,128]{1,0:T(1,128)}', space=vmem, size = 0x12000, scoped, tag = 'internal scratch']
  %s0 = inlined_call_operand.vmem [shape: bf16[16,128], index: 0, kind: input, shape index: {}]
  %s1 = inlined_call_operand.vmem [shape: bf16[3,8,16], index: 1, kind: input, shape index: {}]
  %s2 = inlined_call_operand.vmem [shape: f32[3,8,1], index: 2, kind: input, shape index: {}]
  %s3 = inlined_call_operand.vmem [shape: bf16[3,4,16], index: 3, kind: input, shape index: {}]
  %s4 = inlined_call_operand.vmem [shape: bf16[3,8,4], index: 4, kind: input, shape index: {}]
  %s5 = inlined_call_operand.hbm [shape: f32[8,128], index: 5, kind: output, shape index: {}]
  %s6 = sld [smem:[#allocation0]]
  $region30: #{tpu_custom_call.1} parent=0
    _
  %s8 = ssub.s32 1, %s6
  %s9 = scalar_select 0, %s8, %s6
  $region1: #{tpu_custom_call.1} parent=0
    #allocation2 [shape = 'u8[4096]{0}', space=vmem, size = 0x1000, scoped, tag = 'output window, operand 0, single buffered']
    #allocation3 [shape = 's32[1]{0}', space=sflag, size = 0x4, scoped, tag = 'scoped memory for tpu_custom_call.1']
    %10 = vsyncpa [#allocation3], 0
    // Predicated region
    $region2: #{tpu_custom_call.1} parent=1 // pred_check
      _
    $region3: #{tpu_custom_call.1} parent=1 // pred_check_branch
      %12 = sbr.rel (0) target = $region5
    $region4: #{tpu_custom_call.1} parent=1 // pred_region
      _
    $region5: #{tpu_custom_call.1} parent=1 // pred_fallthru
      _
    // Predicated region
    $region6: #{tpu_custom_call.1} parent=1 // pred_check
      _
    $region7: #{tpu_custom_call.1} parent=1 // pred_check_branch
      %14 = sbr.rel (0) target = $region9
    $region8: #{tpu_custom_call.1} parent=1 // pred_region
      _
    $region9: #{tpu_custom_call.1} parent=1 // pred_fallthru
      _
    // Predicated region
    $region10: #{tpu_custom_call.1} parent=1 // pred_check
      _
    $region11: #{tpu_custom_call.1} parent=1 // pred_check_branch
      %16 = sbr.rel (0) target = $region13
    $region12: #{tpu_custom_call.1} parent=1 // pred_region
      _
    $region13: #{tpu_custom_call.1} parent=1 // pred_fallthru
      _
    // Predicated region
    $region14: #{tpu_custom_call.1} parent=1 // pred_check
      _
    $region15: #{tpu_custom_call.1} parent=1 // pred_check_branch
      %18 = sbr.rel (0) target = $region17
    $region16: #{tpu_custom_call.1} parent=1 // pred_region
      _
    $region17: #{tpu_custom_call.1} parent=1 // pred_fallthru
      _
    // Predicated region
    $region18: #{tpu_custom_call.1} parent=1 // pred_check
      _
    $region19: #{tpu_custom_call.1} parent=1 // pred_check_branch
      %20 = sbr.rel (0) target = $region21
    $region20: #{tpu_custom_call.1} parent=1 // pred_region
      _
    $region21: #{tpu_custom_call.1} parent=1 // pred_fallthru
      _
    %v22 = vld [vmem:[%s0] sm:$0xf]
    %v23 = vld [vmem:[%s0 + $0x4] sm:$0xf]
    %v24 = vld [vmem:[%s1] sm:$0xf]
    %v25 = vld [vmem:[%s3] sm:$0x3]
    %v26 = vld [vmem:[%s4] sm:$0xf]
    %v27 = vld [vmem:[%s2] sm:$0xff]
    %v29 = vcombine.low %v25, %v25
    %v31 = vunpack.c.l.s4 1983009808
    %v32 = vunpack.c.0.s8 %v31
    %v33 = vlaneseq
    %v34 = vshrl.u32 %v33, 7
    %v35 = vsub.s32 %v32, %v34
    %v36 = vrot.slane %v29, %v35
    %vm37 = vcmask 1041408
    %v40 = vsel %vm37, %v24, %v36
    %v43 = vunpack.c.l.b16 %v22
    %v44 = vunpack.c.l.b16 %v23
    %v45 = vpack.c.b16 %v44, %v43
    %vm47 = vcmask 130048
    %v48 = vsel %vm47, %v40, 0
    %50 = vmatprep.subr.bf16.mxu0 0
    %51 = vmatpush1.bf16.msra.mxu0 %v45
    %52 = vmatprep.subr.bf16.mxu0 0
    %53 = vmatpush1.bf16.msra.mxu0 0
    %54 = vmatprep.subr.bf16.mxu0 0
    %55 = vmatpush1.bf16.msra.mxu0 0
    %56 = vmatprep.subr.bf16.mxu0 0
    %57 = vmatpush1.bf16.msra.mxu0 0
    %58 = vmatprep.subr.bf16.mxu0 0
    %59 = vmatpush1.bf16.msra.mxu0 0
    %60 = vmatprep.subr.bf16.mxu0 0
    %61 = vmatpush1.bf16.msra.mxu0 0
    %62 = vmatprep.subr.bf16.mxu0 0
    %63 = vmatpush1.bf16.msra.mxu0 0
    %64 = vmatprep.subr.bf16.mxu0 0
    %65 = vmatpush1.bf16.msra.mxu0 0
    %66 = vmatprep.subr.bf16.mxu0 0
    %67 = vmatpush1.bf16.msra.mxu0 0
    %68 = vmatprep.subr.bf16.mxu0 0
    %69 = vmatpush1.bf16.msra.mxu0 0
    %70 = vmatprep.subr.bf16.mxu0 0
    %71 = vmatpush1.bf16.msra.mxu0 0
    %72 = vmatprep.subr.bf16.mxu0 0
    %73 = vmatpush1.bf16.msra.mxu0 0
    %74 = vmatprep.subr.bf16.mxu0 0
    %75 = vmatpush1.bf16.msra.mxu0 0
    %76 = vmatprep.subr.bf16.mxu0 0
    %77 = vmatpush1.bf16.msra.mxu0 0
    %78 = vmatprep.subr.bf16.mxu0 0
    %79 = vmatpush1.bf16.msra.mxu0 0
    %80 = vmatprep.subr.bf16.mxu0 0
    %81 = vmatpush1.bf16.msra.mxu0 0
    %82 = vmatprep.mubr.bf16.mxu0 0
    %83 = vmatmul.mubr.bf16.gmra.mrb[0].mxu0 %v48
    %v84 = vpop.f32.mrb[0].mxu0
    %v85 = vadd.f32 0.0, %v84
    %v86 = vpop.f32.mrb[0].mxu0
    %v87 = vpop.f32.mrb[0].mxu0
    %v88 = vpop.f32.mrb[0].mxu0
    %89 = vdwg.mxu0
    %v90 = vpack.c.bf16 %v85, %v85
    %v92 = vrot.slane %v90, 2
    %vm93 = vcmask 31744
    %v95 = vsel %vm93, %v26, 0
    %v98 = vsel %vm37, %v92, 0
    %100 = vmatprep.subr.bf16.mxu0 0
    %101 = vmatpush1.bf16.msra.mxu0 %v98
    %102 = vmatprep.subr.bf16.mxu0 0
    %103 = vmatpush1.bf16.msra.mxu0 0
    %104 = vmatprep.subr.bf16.mxu0 0
    %105 = vmatpush1.bf16.msra.mxu0 0
    %106 = vmatprep.subr.bf16.mxu0 0
    %107 = vmatpush1.bf16.msra.mxu0 0
    %108 = vmatprep.subr.bf16.mxu0 0
    %109 = vmatpush1.bf16.msra.mxu0 0
    %110 = vmatprep.subr.bf16.mxu0 0
    %111 = vmatpush1.bf16.msra.mxu0 0
    %112 = vmatprep.subr.bf16.mxu0 0
    %113 = vmatpush1.bf16.msra.mxu0 0
    %114 = vmatprep.subr.bf16.mxu0 0
    %115 = vmatpush1.bf16.msra.mxu0 0
    %116 = vmatprep.subr.bf16.mxu0 0
    %117 = vmatpush1.bf16.msra.mxu0 0
    %118 = vmatprep.subr.bf16.mxu0 0
    %119 = vmatpush1.bf16.msra.mxu0 0
    %120 = vmatprep.subr.bf16.mxu0 0
    %121 = vmatpush1.bf16.msra.mxu0 0
    %122 = vmatprep.subr.bf16.mxu0 0
    %123 = vmatpush1.bf16.msra.mxu0 0
    %124 = vmatprep.subr.bf16.mxu0 0
    %125 = vmatpush1.bf16.msra.mxu0 0
    %126 = vmatprep.subr.bf16.mxu0 0
    %127 = vmatpush1.bf16.msra.mxu0 0
    %128 = vmatprep.subr.bf16.mxu0 0
    %129 = vmatpush1.bf16.msra.mxu0 0
    %130 = vmatprep.subr.bf16.mxu0 0
    %131 = vmatpush1.bf16.msra.mxu0 0
    %132 = vmatprep.mubr.bf16.mxu0 0
    %133 = vmatmul.mubr.bf16.gmra.mrb[0].mxu0 %v95
    %v134 = vpop.f32.mrb[0].mxu0
    %v135 = vadd.f32 0.0, %v134
    %v136 = vpop.f32.mrb[0].mxu0
    %v137 = vpop.f32.mrb[0].mxu0
    %v138 = vpop.f32.mrb[0].mxu0
    %139 = vdwg.mxu0
    %141 = vset.pattern.permute.xlu0 0
    %142 = vperm.xlu0 %141, %v27
    %v143 = vpop.permute.xlu0 %142
    %v145 = vadd.f32 %v85, %v143
    %v146 = vadd.f32 %v145, %v135
    %v147 = vpack.c.bf16 %v146, %v146
    %v148 = vtanh.pop %v85
    %v149 = vpack.c.bf16 %v148, %v148
    %s150 = scalar_lea.vmem %s1, 4
    %v151 = vld [vmem:[%s150] sm:$0xf]
    %s152 = scalar_lea.vmem %s3, 2
    %v153 = vld [vmem:[%s152] sm:$0x3]
    %s154 = scalar_lea.vmem %s4, 4
    %v155 = vld [vmem:[%s154] sm:$0xf]
    %s156 = scalar_lea.vmem %s2, 8
    %v157 = vld [vmem:[%s156] sm:$0xff]
    %v159 = vrot.slane %v149, 2
    %v161 = vsel %vm93, %v153, 0
    %v164 = vsel %vm37, %v159, 0
    %166 = vmatprep.subr.bf16.mxu0 0
    %167 = vmatpush1.bf16.msra.mxu0 %v164
    %168 = vmatprep.subr.bf16.mxu0 0
    %169 = vmatpush1.bf16.msra.mxu0 0
    %170 = vmatprep.subr.bf16.mxu0 0
    %171 = vmatpush1.bf16.msra.mxu0 0
    %172 = vmatprep.subr.bf16.mxu0 0
    %173 = vmatpush1.bf16.msra.mxu0 0
    %174 = vmatprep.subr.bf16.mxu0 0
    %175 = vmatpush1.bf16.msra.mxu0 0
    %176 = vmatprep.subr.bf16.mxu0 0
    %177 = vmatpush1.bf16.msra.mxu0 0
    %178 = vmatprep.subr.bf16.mxu0 0
    %179 = vmatpush1.bf16.msra.mxu0 0
    %180 = vmatprep.subr.bf16.mxu0 0
    %181 = vmatpush1.bf16.msra.mxu0 0
    %182 = vmatprep.subr.bf16.mxu0 0
    %183 = vmatpush1.bf16.msra.mxu0 0
    %184 = vmatprep.subr.bf16.mxu0 0
    %185 = vmatpush1.bf16.msra.mxu0 0
    %186 = vmatprep.subr.bf16.mxu0 0
    %187 = vmatpush1.bf16.msra.mxu0 0
    %188 = vmatprep.subr.bf16.mxu0 0
    %189 = vmatpush1.bf16.msra.mxu0 0
    %190 = vmatprep.subr.bf16.mxu0 0
    %191 = vmatpush1.bf16.msra.mxu0 0
    %192 = vmatprep.subr.bf16.mxu0 0
    %193 = vmatpush1.bf16.msra.mxu0 0
    %194 = vmatprep.subr.bf16.mxu0 0
    %195 = vmatpush1.bf16.msra.mxu0 0
    %196 = vmatprep.subr.bf16.mxu0 0
    %197 = vmatpush1.bf16.msra.mxu0 0
    %198 = vmatprep.mubr.bf16.mxu0 0
    %199 = vmatmul.mubr.bf16.gmra.mrb[0].mxu0 %v161
    %v200 = vpop.f32.mrb[0].mxu0
    %v201 = vadd.f32 0.0, %v200
    %v202 = vpop.f32.mrb[0].mxu0
    %v203 = vpop.f32.mrb[0].mxu0
    %v204 = vpop.f32.mrb[0].mxu0
    %205 = vdwg.mxu0
    %v206 = vpack.c.bf16 %v201, %v201
    %v208 = vsel %vm93, %v155, 0
    %v211 = vsel %vm37, %v206, 0
    %213 = vmatprep.subr.bf16.mxu0 0
    %214 = vmatpush1.bf16.msra.mxu0 %v211
    %215 = vmatprep.subr.bf16.mxu0 0
    %216 = vmatpush1.bf16.msra.mxu0 0
    %217 = vmatprep.subr.bf16.mxu0 0
    %218 = vmatpush1.bf16.msra.mxu0 0
    %219 = vmatprep.subr.bf16.mxu0 0
    %220 = vmatpush1.bf16.msra.mxu0 0
    %221 = vmatprep.subr.bf16.mxu0 0
    %222 = vmatpush1.bf16.msra.mxu0 0
    %223 = vmatprep.subr.bf16.mxu0 0
    %224 = vmatpush1.bf16.msra.mxu0 0
    %225 = vmatprep.subr.bf16.mxu0 0
    %226 = vmatpush1.bf16.msra.mxu0 0
    %227 = vmatprep.subr.bf16.mxu0 0
    %228 = vmatpush1.bf16.msra.mxu0 0
    %229 = vmatprep.subr.bf16.mxu0 0
    %230 = vmatpush1.bf16.msra.mxu0 0
    %231 = vmatprep.subr.bf16.mxu0 0
    %232 = vmatpush1.bf16.msra.mxu0 0
    %233 = vmatprep.subr.bf16.mxu0 0
    %234 = vmatpush1.bf16.msra.mxu0 0
    %235 = vmatprep.subr.bf16.mxu0 0
    %236 = vmatpush1.bf16.msra.mxu0 0
    %237 = vmatprep.subr.bf16.mxu0 0
    %238 = vmatpush1.bf16.msra.mxu0 0
    %239 = vmatprep.subr.bf16.mxu0 0
    %240 = vmatpush1.bf16.msra.mxu0 0
    %241 = vmatprep.subr.bf16.mxu0 0
    %242 = vmatpush1.bf16.msra.mxu0 0
    %243 = vmatprep.subr.bf16.mxu0 0
    %244 = vmatpush1.bf16.msra.mxu0 0
    %245 = vmatprep.mubr.bf16.mxu0 0
    %246 = vmatmul.mubr.bf16.gmra.mrb[0].mxu0 %v208
    %v247 = vpop.f32.mrb[0].mxu0
    %v248 = vadd.f32 0.0, %v247
    %v249 = vpop.f32.mrb[0].mxu0
    %v250 = vpop.f32.mrb[0].mxu0
    %v251 = vpop.f32.mrb[0].mxu0
    %252 = vdwg.mxu0
    %254 = vset.pattern.permute.xlu0 0
    %255 = vperm.xlu0 %254, %v157
    %v256 = vpop.permute.xlu0 %255
    %v259 = vsel %vm93, %v151, 0
    %v262 = vsel %vm37, %v147, 0
    %264 = vmatprep.subr.bf16.mxu0 0
    %265 = vmatpush1.bf16.msra.mxu0 %v262
    %266 = vmatprep.subr.bf16.mxu0 0
    %267 = vmatpush1.bf16.msra.mxu0 0
    %268 = vmatprep.subr.bf16.mxu0 0
    %269 = vmatpush1.bf16.msra.mxu0 0
    %270 = vmatprep.subr.bf16.mxu0 0
    %271 = vmatpush1.bf16.msra.mxu0 0
    %272 = vmatprep.subr.bf16.mxu0 0
    %273 = vmatpush1.bf16.msra.mxu0 0
    %274 = vmatprep.subr.bf16.mxu0 0
    %275 = vmatpush1.bf16.msra.mxu0 0
    %276 = vmatprep.subr.bf16.mxu0 0
    %277 = vmatpush1.bf16.msra.mxu0 0
    %278 = vmatprep.subr.bf16.mxu0 0
    %279 = vmatpush1.bf16.msra.mxu0 0
    %280 = vmatprep.subr.bf16.mxu0 0
    %281 = vmatpush1.bf16.msra.mxu0 0
    %282 = vmatprep.subr.bf16.mxu0 0
    %283 = vmatpush1.bf16.msra.mxu0 0
    %284 = vmatprep.subr.bf16.mxu0 0
    %285 = vmatpush1.bf16.msra.mxu0 0
    %286 = vmatprep.subr.bf16.mxu0 0
    %287 = vmatpush1.bf16.msra.mxu0 0
    %288 = vmatprep.subr.bf16.mxu0 0
    %289 = vmatpush1.bf16.msra.mxu0 0
    %290 = vmatprep.subr.bf16.mxu0 0
    %291 = vmatpush1.bf16.msra.mxu0 0
    %292 = vmatprep.subr.bf16.mxu0 0
    %293 = vmatpush1.bf16.msra.mxu0 0
    %294 = vmatprep.subr.bf16.mxu0 0
    %295 = vmatpush1.bf16.msra.mxu0 0
    %296 = vmatprep.mubr.bf16.mxu0 0
    %297 = vmatmul.mubr.bf16.gmra.mrb[0].mxu0 %v259
    %v298 = vpop.f32.mrb[0].mxu0
    %v299 = vadd.f32 %v256, %v298
    %v300 = vpop.f32.mrb[0].mxu0
    %v301 = vpop.f32.mrb[0].mxu0
    %v302 = vpop.f32.mrb[0].mxu0
    %303 = vdwg.mxu0
    %v304 = vadd.f32 %v299, %v248
    %v305 = vpack.c.bf16 %v304, %v304
    %v306 = vtanh.pop %v201
    %v307 = vpack.c.bf16 %v306, %v306
    %s308 = scalar_lea.vmem %s1, 8
    %v309 = vld [vmem:[%s308] sm:$0xf]
    %s310 = scalar_lea.vmem %s3, 4
    %v311 = vld [vmem:[%s310] sm:$0x3]
    %s312 = scalar_lea.vmem %s4, 8
    %v313 = vld [vmem:[%s312] sm:$0xf]
    %s314 = scalar_lea.vmem %s2, 16
    %v315 = vld [vmem:[%s314] sm:$0xff]
    %v317 = vsel %vm93, %v311, 0
    %v320 = vsel %vm37, %v307, 0
    %322 = vmatprep.subr.bf16.mxu0 0
    %323 = vmatpush1.bf16.msra.mxu0 %v320
    %324 = vmatprep.subr.bf16.mxu0 0
    %325 = vmatpush1.bf16.msra.mxu0 0
    %326 = vmatprep.subr.bf16.mxu0 0
    %327 = vmatpush1.bf16.msra.mxu0 0
    %328 = vmatprep.subr.bf16.mxu0 0
    %329 = vmatpush1.bf16.msra.mxu0 0
    %330 = vmatprep.subr.bf16.mxu0 0
    %331 = vmatpush1.bf16.msra.mxu0 0
    %332 = vmatprep.subr.bf16.mxu0 0
    %333 = vmatpush1.bf16.msra.mxu0 0
    %334 = vmatprep.subr.bf16.mxu0 0
    %335 = vmatpush1.bf16.msra.mxu0 0
    %336 = vmatprep.subr.bf16.mxu0 0
    %337 = vmatpush1.bf16.msra.mxu0 0
    %338 = vmatprep.subr.bf16.mxu0 0
    %339 = vmatpush1.bf16.msra.mxu0 0
    %340 = vmatprep.subr.bf16.mxu0 0
    %341 = vmatpush1.bf16.msra.mxu0 0
    %342 = vmatprep.subr.bf16.mxu0 0
    %343 = vmatpush1.bf16.msra.mxu0 0
    %344 = vmatprep.subr.bf16.mxu0 0
    %345 = vmatpush1.bf16.msra.mxu0 0
    %346 = vmatprep.subr.bf16.mxu0 0
    %347 = vmatpush1.bf16.msra.mxu0 0
    %348 = vmatprep.subr.bf16.mxu0 0
    %349 = vmatpush1.bf16.msra.mxu0 0
    %350 = vmatprep.subr.bf16.mxu0 0
    %351 = vmatpush1.bf16.msra.mxu0 0
    %352 = vmatprep.subr.bf16.mxu0 0
    %353 = vmatpush1.bf16.msra.mxu0 0
    %354 = vmatprep.mubr.bf16.mxu0 0
    %355 = vmatmul.mubr.bf16.gmra.mrb[0].mxu0 %v317
    %v356 = vpop.f32.mrb[0].mxu0
    %v357 = vadd.f32 0.0, %v356
    %v358 = vpop.f32.mrb[0].mxu0
    %v359 = vpop.f32.mrb[0].mxu0
    %v360 = vpop.f32.mrb[0].mxu0
    %361 = vdwg.mxu0
    %v362 = vpack.c.bf16 %v357, %v357
    %v364 = vsel %vm93, %v313, 0
    %v367 = vsel %vm37, %v362, 0
    %369 = vmatprep.subr.bf16.mxu0 0
    %370 = vmatpush1.bf16.msra.mxu0 %v367
    %371 = vmatprep.subr.bf16.mxu0 0
    %372 = vmatpush1.bf16.msra.mxu0 0
    %373 = vmatprep.subr.bf16.mxu0 0
    %374 = vmatpush1.bf16.msra.mxu0 0
    %375 = vmatprep.subr.bf16.mxu0 0
    %376 = vmatpush1.bf16.msra.mxu0 0
    %377 = vmatprep.subr.bf16.mxu0 0
    %378 = vmatpush1.bf16.msra.mxu0 0
    %379 = vmatprep.subr.bf16.mxu0 0
    %380 = vmatpush1.bf16.msra.mxu0 0
    %381 = vmatprep.subr.bf16.mxu0 0
    %382 = vmatpush1.bf16.msra.mxu0 0
    %383 = vmatprep.subr.bf16.mxu0 0
    %384 = vmatpush1.bf16.msra.mxu0 0
    %385 = vmatprep.subr.bf16.mxu0 0
    %386 = vmatpush1.bf16.msra.mxu0 0
    %387 = vmatprep.subr.bf16.mxu0 0
    %388 = vmatpush1.bf16.msra.mxu0 0
    %389 = vmatprep.subr.bf16.mxu0 0
    %390 = vmatpush1.bf16.msra.mxu0 0
    %391 = vmatprep.subr.bf16.mxu0 0
    %392 = vmatpush1.bf16.msra.mxu0 0
    %393 = vmatprep.subr.bf16.mxu0 0
    %394 = vmatpush1.bf16.msra.mxu0 0
    %395 = vmatprep.subr.bf16.mxu0 0
    %396 = vmatpush1.bf16.msra.mxu0 0
    %397 = vmatprep.subr.bf16.mxu0 0
    %398 = vmatpush1.bf16.msra.mxu0 0
    %399 = vmatprep.subr.bf16.mxu0 0
    %400 = vmatpush1.bf16.msra.mxu0 0
    %401 = vmatprep.mubr.bf16.mxu0 0
    %402 = vmatmul.mubr.bf16.gmra.mrb[0].mxu0 %v364
    %v403 = vpop.f32.mrb[0].mxu0
    %v404 = vadd.f32 0.0, %v403
    %v405 = vpop.f32.mrb[0].mxu0
    %v406 = vpop.f32.mrb[0].mxu0
    %v407 = vpop.f32.mrb[0].mxu0
    %408 = vdwg.mxu0
    %410 = vset.pattern.permute.xlu0 0
    %411 = vperm.xlu0 %410, %v315
    %v412 = vpop.permute.xlu0 %411
    %v415 = vsel %vm93, %v309, 0
    %v418 = vsel %vm37, %v305, 0
    %420 = vmatprep.subr.bf16.mxu0 0
    %421 = vmatpush1.bf16.msra.mxu0 %v418
    %422 = vmatprep.subr.bf16.mxu0 0
    %423 = vmatpush1.bf16.msra.mxu0 0
    %424 = vmatprep.subr.bf16.mxu0 0
    %425 = vmatpush1.bf16.msra.mxu0 0
    %426 = vmatprep.subr.bf16.mxu0 0
    %427 = vmatpush1.bf16.msra.mxu0 0
    %428 = vmatprep.subr.bf16.mxu0 0
    %429 = vmatpush1.bf16.msra.mxu0 0
    %430 = vmatprep.subr.bf16.mxu0 0
    %431 = vmatpush1.bf16.msra.mxu0 0
    %432 = vmatprep.subr.bf16.mxu0 0
    %433 = vmatpush1.bf16.msra.mxu0 0
    %434 = vmatprep.subr.bf16.mxu0 0
    %435 = vmatpush1.bf16.msra.mxu0 0
    %436 = vmatprep.subr.bf16.mxu0 0
    %437 = vmatpush1.bf16.msra.mxu0 0
    %438 = vmatprep.subr.bf16.mxu0 0
    %439 = vmatpush1.bf16.msra.mxu0 0
    %440 = vmatprep.subr.bf16.mxu0 0
    %441 = vmatpush1.bf16.msra.mxu0 0
    %442 = vmatprep.subr.bf16.mxu0 0
    %443 = vmatpush1.bf16.msra.mxu0 0
    %444 = vmatprep.subr.bf16.mxu0 0
    %445 = vmatpush1.bf16.msra.mxu0 0
    %446 = vmatprep.subr.bf16.mxu0 0
    %447 = vmatpush1.bf16.msra.mxu0 0
    %448 = vmatprep.subr.bf16.mxu0 0
    %449 = vmatpush1.bf16.msra.mxu0 0
    %450 = vmatprep.subr.bf16.mxu0 0
    %451 = vmatpush1.bf16.msra.mxu0 0
    %452 = vmatprep.mubr.bf16.mxu0 0
    %453 = vmatmul.mubr.bf16.gmra.mrb[0].mxu0 %v415
    %v454 = vpop.f32.mrb[0].mxu0
    %v455 = vadd.f32 %v412, %v454
    %v456 = vpop.f32.mrb[0].mxu0
    %v457 = vpop.f32.mrb[0].mxu0
    %v458 = vpop.f32.mrb[0].mxu0
    %459 = vdwg.mxu0
    %v460 = vadd.f32 %v455, %v404
    %461 = vst [vmem:[#allocation2] sm:$0xff] %v460
    // Predicated region
    $region22: #{tpu_custom_call.1} parent=1 // pred_check
      _
    $region23: #{tpu_custom_call.1} parent=1 // pred_check_branch
      %463 = sbr.rel (0) target = $region25
    $region24: #{tpu_custom_call.1} parent=1 // pred_region
      %s465 = ssub.s32 128, 128
      %466 = vsyncadd [#allocation3], %s465
      %s468 = sshll.u32 [#allocation2], 4
      %s469 = int_to_ptr.vmem [resolvable:$true] %s468
      %471 = dma.vmem_to_hbm [thread:$0]  %s469, 128, %s5, [#allocation3]
    $region25: #{tpu_custom_call.1} parent=1 // pred_fallthru
      _
    // Predicated region
    $region26: #{tpu_custom_call.1} parent=1 // pred_check
      _
    $region27: #{tpu_custom_call.1} parent=1 // pred_check_branch
      %473 = sbr.rel (0) target = $region29
    $region28: #{tpu_custom_call.1} parent=1 // pred_region
      %474 = dma.done [#allocation3], 128
    $region29: #{tpu_custom_call.1} parent=1 // pred_fallthru
      _
    %475 = vsyncpa [#allocation3], 1

</llo_original>
